<compile_context>
chip_gen: v6e
topology: v6e:2x2x1
jax: 0.10.0
libtpu: 0.0.40
codegen_flags: <defaults>
</compile_context>

<pallas_src>
import functools

import jax
import jax.numpy as jnp
from jax.experimental import pallas as pl
from jax.experimental.pallas import tpu as pltpu

LANE = 128   # TPU lane width  (last-dim padding target)
SUB = 8      # TPU sublane width (row-offset alignment inside the param slab)


def _round_up(v, m):
    return ((v + m - 1) // m) * m


# ----------------------------------------------------------------------------
# Kernel
# ----------------------------------------------------------------------------
def _net_kernel(n_state, h_pad, r_b1, r_w2, r_b2, r_mask,
                x_ref, p_ref, out_ref):
    """One independent forward call: x (B, n_state) -> out slab (B, C)."""
    x = x_ref[...]                                           # (B, n_state)

    # Static, tile-aligned views into the single packed parameter slab.
    w1 = p_ref[0:n_state, 0:h_pad]                           # (n_state, h_pad)
    b1 = p_ref[r_b1:r_b1 + 1, 0:h_pad]                       # (1, h_pad)
    w2 = p_ref[r_w2:r_w2 + h_pad, :]                         # (h_pad, C)
    b2 = p_ref[r_b2:r_b2 + 1, :]                             # (1, C)
    mask = p_ref[r_mask:r_mask + 1, :]                       # (1, C)  1.0 = actor col

    # Fused first layer (actor hidden | critic hidden | zero pad) -> ReLU.
    h = jnp.dot(x, w1, preferred_element_type=jnp.float32)   # (B, h_pad)
    h = jnp.maximum(h + b1, 0.0)

    # Fused block-diagonal second layer -> (B, C) slab:
    #   cols [0, n_action) actor logits, col n_action critic value, rest zero.
    y = jnp.dot(h, w2, preferred_element_type=jnp.float32)   # (B, C)
    y = y + b2

    # Softmax over axis 0 (batch) — matches F.softmax(actor(x), 0) per call.
    m = jnp.max(y, axis=0, keepdims=True)
    e = jnp.exp(y - m)
    sm = e / jnp.sum(e, axis=0, keepdims=True)               # exact normalization

    # Single unmasked lane-dense store: softmax in actor columns, raw y elsewhere.
    out_ref[...] = jnp.where(mask > 0.0, sm, y)


# ----------------------------------------------------------------------------
# Parameter packing: one slab, 8-row-aligned sections, 128-lane padded.
# ----------------------------------------------------------------------------
def pack_params(p):
    """Pack fused actor/critic weights into a single (R, C) f32 slab.

    Row layout (each section starts on an 8-row boundary):
      [0, n_state)            : w1  = [aw1 | cw1]   (lanes [0, h_tot))
      r_b1                    : b1  = [ab1 | cb1]
      [r_w2, r_w2 + h_pad)    : w2  = blockdiag(aw2, cw2)  (lanes [0, n_out))
      r_b2                    : b2  = [ab2 | cb2]
      r_mask                  : mask (1.0 on actor columns, else 0.0)
    """
    aw1, ab1, aw2, ab2 = p["aw1"], p["ab1"], p["aw2"], p["ab2"]
    cw1, cb1, cw2, cb2 = p["cw1"], p["cb1"], p["cw2"], p["cb2"]

    n_state = aw1.shape[0]
    ha, na = aw2.shape
    hc, nv = cw2.shape                        # nv == 1
    h_tot = ha + hc
    n_out = na + nv
    h_pad = _round_up(h_tot, LANE)
    n_pad = _round_up(n_out, LANE)
    C = max(h_pad, n_pad)

    r_b1 = _round_up(n_state, SUB)
    r_w2 = r_b1 + SUB
    r_b2 = r_w2 + h_pad
    r_mask = r_b2 + SUB
    R = r_mask + SUB                          # multiple of 8

    w1 = jnp.concatenate([aw1, cw1], axis=1)  # (n_state, h_tot)
    b1 = jnp.concatenate([ab1, cb1], axis=1)  # (1, h_tot)

    slab = jnp.zeros((R, C), jnp.float32)
    slab = slab.at[:n_state, :h_tot].set(w1)
    slab = slab.at[r_b1, :h_tot].set(b1[0])
    slab = slab.at[r_w2:r_w2 + ha, :na].set(aw2)
    slab = slab.at[r_w2 + ha:r_w2 + h_tot, na:n_out].set(cw2)
    slab = slab.at[r_b2, :na].set(ab2[0])
    slab = slab.at[r_b2, na:n_out].set(cb2[0])
    slab = slab.at[r_mask, :na].set(1.0)
    return slab


# ----------------------------------------------------------------------------
# Wrappers
# ----------------------------------------------------------------------------
@functools.partial(jax.jit, static_argnames=("n_action",))
def net_forward_steps(xs, slab, *, n_action):
    """T independent forward calls in one pallas_call.

    xs:   (T, B, n_state) f32 — T timesteps / env mini-batches.
    slab: packed params from pack_params().
    Returns policy (T, B, n_action), value (T, B, 1); softmax is over the
    batch axis of each step, matching the module's per-call F.softmax(., 0).
    """
    T, B, n_state = xs.shape
    R, C = slab.shape

    # Recover the static slab layout from the shapes (mirrors pack_params).
    r_b1 = _round_up(n_state, SUB)
    r_w2 = r_b1 + SUB
    h_pad = R - r_w2 - 2 * SUB
    r_b2 = r_w2 + h_pad
    r_mask = r_b2 + SUB

    kernel = functools.partial(_net_kernel, n_state, h_pad,
                               r_b1, r_w2, r_b2, r_mask)

    flops = 2 * T * B * (n_state * h_pad + h_pad * C)
    bytes_accessed = 4 * (xs.size + slab.size + T * B * C)

    out = pl.pallas_call(
        kernel,
        out_shape=jax.ShapeDtypeStruct((T, B, C), jnp.float32),
        grid=(T,),
        in_specs=[
            # One step's batch per grid point.
            pl.BlockSpec((pl.Squeezed(), B, n_state), lambda t: (t, 0, 0)),
            # Params: constant block index -> DMA'd once, resident across T.
            pl.BlockSpec((R, C), lambda t: (0, 0)),
        ],
        out_specs=pl.BlockSpec((pl.Squeezed(), B, C), lambda t: (t, 0, 0)),
        compiler_params=pltpu.CompilerParams(
            dimension_semantics=("parallel",)),   # shard steps across v7x's 2 TCs
        cost_estimate=pl.CostEstimate(
            flops=flops,
            transcendentals=T * B * C,
            bytes_accessed=bytes_accessed,
        ),
    )(xs, slab)

    policy = out[:, :, :n_action]
    value = out[:, :, n_action:n_action + 1]
    return policy, value


def net_forward(x, slab, *, n_action):
    """Single forward call (matches Net.forward): x (B, n_state)."""
    policy, value = net_forward_steps(x[None], slab, n_action=n_action)
    return policy[0], value[0]


# ----------------------------------------------------------------------------
# Synthetic init + pure-JAX reference
# ----------------------------------------------------------------------------
def init_params(key, n_state, n_action, n_hidden_actor, n_hidden_critic):
    """Deterministic synthetic weights, stored pre-transposed as (in, out)."""
    ks = jax.random.split(key, 8)

    def lin(kw, kb, n_in, n_out):
        bound = 1.0 / jnp.sqrt(jnp.float32(n_in))
        w = jax.random.uniform(kw, (n_in, n_out), jnp.float32, -bound, bound)
        b = jax.random.uniform(kb, (1, n_out), jnp.float32, -bound, bound)
        return w, b

    aw1, ab1 = lin(ks[0], ks[1], n_state, n_hidden_actor)
    aw2, ab2 = lin(ks[2], ks[3], n_hidden_actor, n_action)
    cw1, cb1 = lin(ks[4], ks[5], n_state, n_hidden_critic)
    cw2, cb2 = lin(ks[6], ks[7], n_hidden_critic, 1)
    return dict(aw1=aw1, ab1=ab1, aw2=aw2, ab2=ab2,
                cw1=cw1, cb1=cb1, cw2=cw2, cb2=cb2)


def net_forward_ref(x, p):
    """Pure-JAX reference (full-precision matmuls)."""
    hi = jax.lax.Precision.HIGHEST
    h_a = jnp.maximum(jnp.dot(x, p["aw1"], precision=hi) + p["ab1"], 0.0)
    logits = jnp.dot(h_a, p["aw2"], precision=hi) + p["ab2"]
    policy = jax.nn.softmax(logits, axis=0)          # dim=0, as in the module
    h_c = jnp.maximum(jnp.dot(x, p["cw1"], precision=hi) + p["cb1"], 0.0)
    value = jnp.dot(h_c, p["cw2"], precision=hi) + p["cb2"]
    return policy, value


if __name__ == "__main__":
    n_state, n_action = 16, 4
    n_hidden_actor, n_hidden_critic = 32, 32
    T, batch = 4, 128   # B >= 128 fills the MXU M rows; T amortizes weight DMA

    key = jax.random.PRNGKey(0)
    k_x, k_p = jax.random.split(key)
    xs = jax.random.normal(k_x, (T, batch, n_state), dtype=jnp.float32)
    params = init_params(k_p, n_state, n_action, n_hidden_actor, n_hidden_critic)
    slab = pack_params(params)

    # Multi-step (weight-resident grid) entry point.
    policy, value = net_forward_steps(xs, slab, n_action=n_action)
    jax.block_until_ready((policy, value))

    # Single-call entry point (module's forward signature).
    p0, v0 = net_forward(xs[0], slab, n_action=n_action)
    jax.block_until_ready((p0, v0))

    assert policy.shape == (T, batch, n_action) and value.shape == (T, batch, 1)
    for t in range(T):
        policy_ref, value_ref = net_forward_ref(xs[t], params)
        assert jnp.allclose(policy[t], policy_ref, atol=2e-3, rtol=2e-3)
        assert jnp.allclose(value[t], value_ref, atol=1e-4, rtol=1e-4)
        # softmax over dim 0 -> each action column sums to ~1 across the batch
        assert jnp.allclose(jnp.sum(policy[t], axis=0),
                            jnp.ones((n_action,)), atol=2e-3)
    assert jnp.allclose(p0, policy[0]) and jnp.allclose(v0, value[0])

    print("KERNEL_OK")
</pallas_src>

<mosaic_0001>
module attributes {stable_mosaic.version = 11 : i64} {
  func.func @_net_kernel(%arg0: i32, %arg1: memref<1x128x16xf32, #tpu.memory_space<vmem>>, %arg2: memref<168x128xf32, #tpu.memory_space<vmem>>, %arg3: memref<1x128x128xf32, #tpu.memory_space<vmem>>) attributes {dimension_semantics = [#tpu.dimension_semantics<parallel>], iteration_bounds = array<i64: 4>, scalar_prefetch = 0 : i64, scratch_operands = 0 : i64, tpu.core_type = #tpu.core_type<tc>, window_params = [{transform_indices = @transform_0, window_bounds = array<i64: 1, 128, 16>}, {pipeline_mode = #tpu.pipeline_mode<synchronous>, transform_indices = @transform_1, window_bounds = array<i64: 168, 128>}, {transform_indices = @transform_2, window_bounds = array<i64: 1, 128, 128>}]} {
    %c0 = arith.constant 0 : index
    %c0_0 = arith.constant 0 : index
    %c0_1 = arith.constant 0 : index
    %0 = vector.load %arg1[%c0, %c0_0, %c0_1] : memref<1x128x16xf32, #tpu.memory_space<vmem>>, vector<1x128x16xf32>
    %1 = vector.shape_cast %0 : vector<1x128x16xf32> to vector<128x16xf32>
    %c0_2 = arith.constant 0 : index
    %c0_3 = arith.constant 0 : index
    %2 = vector.load %arg2[%c0_2, %c0_3] : memref<168x128xf32, #tpu.memory_space<vmem>>, vector<16x128xf32>
    %c16 = arith.constant 16 : index
    %c0_4 = arith.constant 0 : index
    %3 = vector.load %arg2[%c16, %c0_4] : memref<168x128xf32, #tpu.memory_space<vmem>>, vector<1x128xf32>
    %c24 = arith.constant 24 : index
    %c0_5 = arith.constant 0 : index
    %4 = vector.load %arg2[%c24, %c0_5] : memref<168x128xf32, #tpu.memory_space<vmem>>, vector<128x128xf32>
    %c152 = arith.constant 152 : index
    %c0_6 = arith.constant 0 : index
    %5 = vector.load %arg2[%c152, %c0_6] : memref<168x128xf32, #tpu.memory_space<vmem>>, vector<1x128xf32>
    %c160 = arith.constant 160 : index
    %c0_7 = arith.constant 0 : index
    %6 = vector.load %arg2[%c160, %c0_7] : memref<168x128xf32, #tpu.memory_space<vmem>>, vector<1x128xf32>
    %cst = arith.constant dense<0.000000e+00> : vector<128x128xf32>
    %7 = tpu.matmul %1, %2, %cst {dimension_numbers = #tpu.dot_dimension_numbers<[1], [0], [0], [1], [0, 0, 1, 1], [], []>} : vector<128x16xf32>, vector<16x128xf32>, vector<128x128xf32> -> vector<128x128xf32>
    %8 = vector.broadcast %3 : vector<1x128xf32> to vector<128x128xf32>
    %9 = arith.addf %7, %8 : vector<128x128xf32>
    %cst_8 = arith.constant 0.000000e+00 : f32
    %10 = vector.broadcast %cst_8 : f32 to vector<128x128xf32>
    %11 = arith.maximumf %9, %10 : vector<128x128xf32>
    %cst_9 = arith.constant dense<0.000000e+00> : vector<128x128xf32>
    %12 = tpu.matmul %11, %4, %cst_9 {dimension_numbers = #tpu.dot_dimension_numbers<[1], [0], [0], [1], [0, 0, 1, 1], [], []>} : vector<128x128xf32>, vector<128x128xf32>, vector<128x128xf32> -> vector<128x128xf32>
    %13 = vector.broadcast %5 : vector<1x128xf32> to vector<128x128xf32>
    %14 = arith.addf %12, %13 : vector<128x128xf32>
    %cst_10 = arith.constant dense<0xFF800000> : vector<128xf32>
    %15 = vector.multi_reduction <maximumf>, %14, %cst_10 [0] : vector<128x128xf32> to vector<128xf32>
    %16 = vector.shape_cast %15 : vector<128xf32> to vector<1x128xf32>
    %17 = vector.broadcast %16 : vector<1x128xf32> to vector<128x128xf32>
    %18 = arith.subf %14, %17 : vector<128x128xf32>
    %19 = math.exp %18 : vector<128x128xf32>
    %cst_11 = arith.constant dense<0.000000e+00> : vector<128xf32>
    %20 = vector.multi_reduction <add>, %19, %cst_11 [0] : vector<128x128xf32> to vector<128xf32>
    %21 = vector.shape_cast %20 : vector<128xf32> to vector<1x128xf32>
    %22 = vector.broadcast %21 : vector<1x128xf32> to vector<128x128xf32>
    %23 = arith.divf %19, %22 : vector<128x128xf32>
    %cst_12 = arith.constant 0.000000e+00 : f32
    %24 = vector.broadcast %cst_12 : f32 to vector<1x128xf32>
    %25 = arith.cmpf ogt, %6, %24 : vector<1x128xf32>
    %26 = vector.shape_cast %25 : vector<1x128xi1> to vector<1x128xi1>
    %27 = vector.broadcast %26 : vector<1x128xi1> to vector<128x128xi1>
    %28 = arith.select %27, %23, %14 : vector<128x128xi1>, vector<128x128xf32>
    %c0_13 = arith.constant 0 : index
    %c0_14 = arith.constant 0 : index
    %c0_15 = arith.constant 0 : index
    %29 = vector.load %arg3[%c0_13, %c0_14, %c0_15] : memref<1x128x128xf32, #tpu.memory_space<vmem>>, vector<1x128x128xf32>
    %30 = vector.shape_cast %29 : vector<1x128x128xf32> to vector<128x128xf32>
    %31 = vector.shape_cast %28 : vector<128x128xf32> to vector<1x128x128xf32>
    tpu.vector_store %arg3[%c0_13, %c0_14, %c0_15], %31 {strides = array<i32>} : memref<1x128x128xf32, #tpu.memory_space<vmem>>, vector<1x128x128xf32>,
    return
  }
  func.func @transform_0(%arg0: i32) -> (i32, i32, i32) {
    %c0_i32 = arith.constant 0 : i32
    %c0_i32_0 = arith.constant 0 : i32
    %c0_i32_1 = arith.constant 0 : i32
    return %arg0, %c0_i32, %c0_i32_0 : i32, i32, i32
  }
  func.func @transform_1(%arg0: i32) -> (i32, i32) {
    %c0_i32 = arith.constant 0 : i32
    %c0_i32_0 = arith.constant 0 : i32
    %c0_i32_1 = arith.constant 0 : i32
    return %c0_i32, %c0_i32_0 : i32, i32
  }
  func.func @transform_2(%arg0: i32) -> (i32, i32, i32) {
    %c0_i32 = arith.constant 0 : i32
    %c0_i32_0 = arith.constant 0 : i32
    %c0_i32_1 = arith.constant 0 : i32
    return %arg0, %c0_i32, %c0_i32_0 : i32, i32, i32
  }
}

</mosaic_0001>

<llo_original>
// kernel: net_forward_steps.1
$region0: #{net_forward_steps.1}
  #allocation0 [shape = 'u32[]', space=smem, size = 0x4, offset = 0x4, fixed_abs, tag = 'smem constant byte address 0x4 - core index']
  #allocation1 [shape = 'u32[144,128]{1,0:T(1,128)}', space=vmem, size = 0x12000, scoped, tag = 'internal scratch']
  %s0 = inlined_call_operand.vmem [shape: f32[4,128,16], index: 0, kind: input, shape index: {}]
  %s1 = inlined_call_operand.vmem [shape: f32[168,128], index: 1, kind: input, shape index: {}]
  %s2 = inlined_call_operand.vmem [shape: f32[4,128,128], index: 2, kind: output, shape index: {}]
  %s3 = sld [smem:[#allocation0]]
  $region41: #{net_forward_steps.1} parent=0
    _
  %s5 = ssub.s32 1, %s3
  %s6 = scalar_select 0, %s5, %s3
  loop: start=0, step=1, limit=6
  $region2: #{net_forward_steps.1} parent=0 // loop_pre_header
    _
  $region3: #{net_forward_steps.1} parent=0 // loop_header
    %s8 = sphi 0, %s12
    %p9 = scmp.ge.s32.totalorder %s8, 6
    %s18 = sphi 0, %s20
    %s21 = sphi 0, %s18
    %s22 = sphi 0, %s21
    %s38 = sphi 0, %s22
    %s42 = sphi 0, %s42
    %s44 = sphi 0, %s42
    %s45 = sphi 0, %s44
    %s59 = sphi 0, %s45
    %s65 = sphi 0, %s67
    %s68 = sphi 0, %s65
    %s69 = sphi 0, %s68
    %s85 = sphi 0, %s69
  $region4: #{net_forward_steps.1} parent=0 // loop_header_branch
    %11 = sbr.rel (%p9) target = $region8
  $region5: #{net_forward_steps.1} parent=0 // loop_body
    %s13 = ssub.s32 %s8, 1
    %s14 = ssub.s32 %s8, 2
    %s15 = sadd.s32 %s8, 1
    %s16 = ssub.s32 %s8, %s15
    %p17 = scmp.eq.s32.totalorder %s16, 0
    %s19 = sadd.s32 %s18, 1
    %s20 = scalar_select %p17, %s18, %s19
    %p23 = pneg %p17
    %p24 = scmp.eq.s32.totalorder %s8, 3
    %p25 = por %p23, %p24
    %p26 = scmp.ne.s32.totalorder %s18, %s21
    %p27 = scmp.eq.s32.totalorder %s8, 0
    %p28 = por %p26, %p27
    %p29 = scmp.ne.s32.totalorder %s18, %s21
    %p30 = scmp.eq.s32.totalorder %s13, 3
    %p31 = por %p29, %p30
    %p32 = scmp.ne.s32.totalorder %s21, %s22
    %p33 = scmp.eq.s32.totalorder %s13, 0
    %p34 = por %p32, %p33
    %p35 = scmp.ne.s32.totalorder %s21, %s22
    %p36 = scmp.eq.s32.totalorder %s14, 3
    %p37 = por %p35, %p36
    %p39 = scmp.ne.s32.totalorder %s22, %s38
    %p40 = scmp.eq.s32.totalorder %s14, 0
    %p41 = por %p39, %p40
    %s43 = sadd.s32 %s42, 1
    %p46 = scmp.eq.s32.totalorder %s8, 3
    %p47 = scmp.ne.s32.totalorder %s42, %s44
    %p48 = scmp.eq.s32.totalorder %s8, 0
    %p49 = por %p47, %p48
    %p50 = scmp.ne.s32.totalorder %s42, %s44
    %p51 = scmp.eq.s32.totalorder %s13, 3
    %p52 = por %p50, %p51
    %p53 = scmp.ne.s32.totalorder %s44, %s45
    %p54 = scmp.eq.s32.totalorder %s13, 0
    %p55 = por %p53, %p54
    %p56 = scmp.ne.s32.totalorder %s44, %s45
    %p57 = scmp.eq.s32.totalorder %s14, 3
    %p58 = por %p56, %p57
    %p60 = scmp.ne.s32.totalorder %s45, %s59
    %p61 = scmp.eq.s32.totalorder %s14, 0
    %p62 = por %p60, %p61
    %s63 = ssub.s32 %s8, %s15
    %p64 = scmp.eq.s32.totalorder %s63, 0
    %s66 = sadd.s32 %s65, 1
    %s67 = scalar_select %p64, %s65, %s66
    %p70 = pneg %p64
    %p71 = scmp.eq.s32.totalorder %s8, 3
    %p72 = por %p70, %p71
    %p73 = scmp.ne.s32.totalorder %s65, %s68
    %p74 = scmp.eq.s32.totalorder %s8, 0
    %p75 = por %p73, %p74
    %p76 = scmp.ne.s32.totalorder %s65, %s68
    %p77 = scmp.eq.s32.totalorder %s13, 3
    %p78 = por %p76, %p77
    %p79 = scmp.ne.s32.totalorder %s68, %s69
    %p80 = scmp.eq.s32.totalorder %s13, 0
    %p81 = por %p79, %p80
    %p82 = scmp.ne.s32.totalorder %s68, %s69
    %p83 = scmp.eq.s32.totalorder %s14, 3
    %p84 = por %p82, %p83
    %p86 = scmp.ne.s32.totalorder %s69, %s85
    %p87 = scmp.eq.s32.totalorder %s14, 0
    %p88 = por %p86, %p87
    %p89 = scmp.le.s32.totalorder 1, %s8
    %p90 = scmp.lt.s32.totalorder %s8, 5
    %p91 = pnand %p89, %p90
    %p92 = pneg %p91
    // Predicated region
    $region9: #{net_forward_steps.1} parent=5 // pred_check
      _
    $region10: #{net_forward_steps.1} parent=5 // pred_check_branch
      %94 = sbr.rel (%p91) target = $region12
    $region11: #{net_forward_steps.1} parent=5 // pred_region
      %s95 = ssub.s32 %s8, 1
      // Predicated region
      $region13: #{net_forward_steps.1} parent=11 // pred_check
        %p96 = pneg %p55
      $region14: #{net_forward_steps.1} parent=11 // pred_check_branch
        %98 = sbr.rel (%p96) target = $region16
      $region15: #{net_forward_steps.1} parent=11 // pred_region
        _
      $region16: #{net_forward_steps.1} parent=11 // pred_fallthru
        _
    $region12: #{net_forward_steps.1} parent=5 // pred_fallthru
      _
    %p99 = scmp.lt.s32.totalorder %s8, 4
    // Predicated region
    $region17: #{net_forward_steps.1} parent=5 // pred_check
      %p100 = pneg %p99
    $region18: #{net_forward_steps.1} parent=5 // pred_check_branch
      %102 = sbr.rel (%p100) target = $region20
    $region19: #{net_forward_steps.1} parent=5 // pred_region
      // Predicated region
      $region21: #{net_forward_steps.1} parent=19 // pred_check
        %p103 = pneg %p28
      $region22: #{net_forward_steps.1} parent=19 // pred_check_branch
        %105 = sbr.rel (%p103) target = $region24
      $region23: #{net_forward_steps.1} parent=19 // pred_region
        %p106 = scmp.lt.s32.totalorder %s8, 3
        %s107 = scalar_select %p106, %s8, 3
        %s108 = smul.addr %s107, 16
        %s109 = smul.addr %s108, 8
        %s110 = scalar_lea.vmem %s0, %s109
      $region24: #{net_forward_steps.1} parent=19 // pred_fallthru
        _
    $region20: #{net_forward_steps.1} parent=5 // pred_fallthru
      _
    %p111 = scmp.le.s32.totalorder 1, %s8
    %p112 = scmp.lt.s32.totalorder %s8, 5
    %p113 = pnand %p111, %p112
    %p114 = pneg %p113
    // Predicated region
    $region25: #{net_forward_steps.1} parent=5 // pred_check
      _
    $region26: #{net_forward_steps.1} parent=5 // pred_check_branch
      %116 = sbr.rel (%p113) target = $region28
    $region27: #{net_forward_steps.1} parent=5 // pred_region
      %s117 = ssub.s32 %s8, 1
      %p118 = scmp.lt.s32.totalorder %s13, 3
      %s119 = scalar_select %p118, %s13, 3
      %s120 = smul.addr %s119, 16
      %s121 = smul.addr %s120, 8
      %s122 = scalar_lea.vmem %s0, %s121
      %p123 = pneg %p34
      %p124 = pneg %p31
      %p125 = pneg %p55
      %p126 = pneg %p52
      %p127 = pneg %p81
      %p128 = pneg %p78
      %p129 = scmp.lt.s32.totalorder %s13, 3
      %s130 = scalar_select %p129, %s13, 3
      %s131 = smul.addr %s130, 16
      %s132 = smul.addr %s131, 8
      %s133 = scalar_lea.vmem %s2, %s132
      %p134 = scmp.lt.s32.totalorder %s13, 3
      %s135 = scalar_select %p134, %s13, 3
      %s136 = smul.addr %s135, 16
      %s137 = smul.addr %s136, 8
      %s138 = scalar_lea.vmem %s0, %s137
      %p139 = scmp.lt.s32.totalorder %s13, 3
      %s140 = scalar_select %p139, %s13, 3
      %s141 = smul.addr %s140, 16
      %s142 = smul.addr %s141, 8
      %s143 = scalar_lea.vmem %s2, %s142
      %v144 = vld [vmem:[%s138] sm:$0xff]
      %v145 = vld [vmem:[%s138 + $0x8] sm:$0xff]
      %v146 = vld [vmem:[%s138 + $0x10] sm:$0xff]
      %v147 = vld [vmem:[%s138 + $0x18] sm:$0xff]
      %v148 = vld [vmem:[%s138 + $0x20] sm:$0xff]
      %v149 = vld [vmem:[%s138 + $0x28] sm:$0xff]
      %v150 = vld [vmem:[%s138 + $0x30] sm:$0xff]
      %v151 = vld [vmem:[%s138 + $0x38] sm:$0xff]
      %v152 = vld [vmem:[%s138 + $0x40] sm:$0xff]
      %v153 = vld [vmem:[%s138 + $0x48] sm:$0xff]
      %v154 = vld [vmem:[%s138 + $0x50] sm:$0xff]
      %v155 = vld [vmem:[%s138 + $0x58] sm:$0xff]
      %v156 = vld [vmem:[%s138 + $0x60] sm:$0xff]
      %v157 = vld [vmem:[%s138 + $0x68] sm:$0xff]
      %v158 = vld [vmem:[%s138 + $0x70] sm:$0xff]
      %v159 = vld [vmem:[%s138 + $0x78] sm:$0xff]
      %v160 = vld [vmem:[%s1] sm:$0xff]
      %v161 = vld [vmem:[%s1 + $0x8] sm:$0xff]
      %v162 = vld [vmem:[%s1 + $0x10] sm:$0x1]
      %v163 = vld [vmem:[%s1 + $0x18] sm:$0xff]
      %v164 = vld [vmem:[%s1 + $0x20] sm:$0xff]
      %v165 = vld [vmem:[%s1 + $0x28] sm:$0xff]
      %v166 = vld [vmem:[%s1 + $0x30] sm:$0xff]
      %v167 = vld [vmem:[%s1 + $0x38] sm:$0xff]
      %v168 = vld [vmem:[%s1 + $0x40] sm:$0xff]
      %v169 = vld [vmem:[%s1 + $0x48] sm:$0xff]
      %v170 = vld [vmem:[%s1 + $0x50] sm:$0xff]
      %v171 = vld [vmem:[%s1 + $0x58] sm:$0xff]
      %v172 = vld [vmem:[%s1 + $0x60] sm:$0xff]
      %v173 = vld [vmem:[%s1 + $0x68] sm:$0xff]
      %v174 = vld [vmem:[%s1 + $0x70] sm:$0xff]
      %v175 = vld [vmem:[%s1 + $0x78] sm:$0xff]
      %v176 = vld [vmem:[%s1 + $0x80] sm:$0xff]
      %v177 = vld [vmem:[%s1 + $0x88] sm:$0xff]
      %v178 = vld [vmem:[%s1 + $0x90] sm:$0xff]
      %v179 = vld [vmem:[%s1 + $0x98] sm:$0x1]
      %v180 = vld [vmem:[%s1 + $0xa0] sm:$0x1]
      %v181 = vlaneseq
      %v182 = vshrl.u32 %v181, 7
      %v183 = vsub.s32 0, %v182
      %v184 = vrot.slane %v162, %v183
      %vm185 = vcmask 130048
      %v187 = vsel %vm185, %v144, 0
      %v190 = vsel %vm185, %v145, 0
      %v193 = vsel %vm185, %v146, 0
      %v196 = vsel %vm185, %v147, 0
      %v199 = vsel %vm185, %v148, 0
      %v202 = vsel %vm185, %v149, 0
      %v205 = vsel %vm185, %v150, 0
      %v208 = vsel %vm185, %v151, 0
      %v211 = vsel %vm185, %v152, 0
      %v214 = vsel %vm185, %v153, 0
      %v217 = vsel %vm185, %v154, 0
      %v220 = vsel %vm185, %v155, 0
      %v223 = vsel %vm185, %v156, 0
      %v226 = vsel %vm185, %v157, 0
      %v229 = vsel %vm185, %v158, 0
      %v232 = vsel %vm185, %v159, 0
      %234 = vmatprep.subr.mxu0 0.0
      %235 = vmatpush1.msra.mxu0 0.0
      %236 = vmatprep.subr.mxu0 0.0
      %237 = vmatpush1.msra.mxu0 0.0
      %238 = vmatprep.subr.mxu0 0.0
      %239 = vmatpush1.msra.mxu0 0.0
      %240 = vmatprep.subr.mxu0 0.0
      %241 = vmatpush1.msra.mxu0 0.0
      %242 = vmatprep.subr.mxu0 0.0
      %243 = vmatpush1.msra.mxu0 0.0
      %244 = vmatprep.subr.mxu0 0.0
      %245 = vmatpush1.msra.mxu0 0.0
      %246 = vmatprep.subr.mxu0 0.0
      %247 = vmatpush1.msra.mxu0 0.0
      %248 = vmatprep.subr.mxu0 0.0
      %249 = vmatpush1.msra.mxu0 0.0
      %250 = vmatprep.subr.mxu0 0.0
      %251 = vmatpush1.msra.mxu0 0.0
      %252 = vmatprep.subr.mxu0 0.0
      %253 = vmatpush1.msra.mxu0 0.0
      %254 = vmatprep.subr.mxu0 0.0
      %255 = vmatpush1.msra.mxu0 0.0
      %256 = vmatprep.subr.mxu0 0.0
      %257 = vmatpush1.msra.mxu0 0.0
      %258 = vmatprep.subr.mxu0 0.0
      %259 = vmatpush1.msra.mxu0 0.0
      %260 = vmatprep.subr.mxu0 0.0
      %261 = vmatpush1.msra.mxu0 0.0
      %262 = vmatprep.subr.mxu0 0.0
      %263 = vmatpush1.msra.mxu0 %v161
      %264 = vmatprep.subr.mxu0 0.0
      %265 = vmatpush1.msra.mxu0 %v160
      %266 = vmatprep.subr.mxu0 0.0
      %267 = vmatpush2.msra.mxu0 0.0
      %268 = vmatprep.subr.mxu0 0.0
      %269 = vmatpush2.msra.mxu0 0.0
      %270 = vmatprep.subr.mxu0 0.0
      %271 = vmatpush2.msra.mxu0 0.0
      %272 = vmatprep.subr.mxu0 0.0
      %273 = vmatpush2.msra.mxu0 0.0
      %274 = vmatprep.subr.mxu0 0.0
      %275 = vmatpush2.msra.mxu0 0.0
      %276 = vmatprep.subr.mxu0 0.0
      %277 = vmatpush2.msra.mxu0 0.0
      %278 = vmatprep.subr.mxu0 0.0
      %279 = vmatpush2.msra.mxu0 0.0
      %280 = vmatprep.subr.mxu0 0.0
      %281 = vmatpush2.msra.mxu0 0.0
      %282 = vmatprep.subr.mxu0 0.0
      %283 = vmatpush2.msra.mxu0 0.0
      %284 = vmatprep.subr.mxu0 0.0
      %285 = vmatpush2.msra.mxu0 0.0
      %286 = vmatprep.subr.mxu0 0.0
      %287 = vmatpush2.msra.mxu0 0.0
      %288 = vmatprep.subr.mxu0 0.0
      %289 = vmatpush2.msra.mxu0 0.0
      %290 = vmatprep.subr.mxu0 0.0
      %291 = vmatpush2.msra.mxu0 0.0
      %292 = vmatprep.subr.mxu0 0.0
      %293 = vmatpush2.msra.mxu0 0.0
      %294 = vmatprep.subr.mxu0 0.0
      %295 = vmatpush2.msra.mxu0 0.0
      %296 = vmatprep.subr.mxu0 0.0
      %297 = vmatpush2.msra.mxu0 0.0
      %298 = vmatprep.mubr.f32.mxu0 0.0
      %299 = vmatmul.mubr.f32.gmra.mxu0 %v187
      %v300 = vpop.f32.mrf.mxu0
      %v301 = vadd.f32 %v184, %v300
      %v302 = vpop.f32.mrf.mxu0
      %303 = vmatprep.mubr.f32.mxu0 0.0
      %304 = vmatmul.mubr.f32.gmra.mxu0 %v190
      %v305 = vpop.f32.mrf.mxu0
      %v306 = vadd.f32 %v184, %v305
      %v307 = vpop.f32.mrf.mxu0
      %308 = vmatprep.mubr.f32.mxu0 0.0
      %309 = vmatmul.mubr.f32.gmra.mxu0 %v193
      %v310 = vpop.f32.mrf.mxu0
      %v311 = vadd.f32 %v184, %v310
      %v312 = vpop.f32.mrf.mxu0
      %313 = vmatprep.mubr.f32.mxu0 0.0
      %314 = vmatmul.mubr.f32.gmra.mxu0 %v196
      %v315 = vpop.f32.mrf.mxu0
      %v316 = vadd.f32 %v184, %v315
      %v317 = vpop.f32.mrf.mxu0
      %318 = vmatprep.mubr.f32.mxu0 0.0
      %319 = vmatmul.mubr.f32.gmra.mxu0 %v199
      %v320 = vpop.f32.mrf.mxu0
      %v321 = vadd.f32 %v184, %v320
      %v322 = vpop.f32.mrf.mxu0
      %323 = vmatprep.mubr.f32.mxu0 0.0
      %324 = vmatmul.mubr.f32.gmra.mxu0 %v202
      %v325 = vpop.f32.mrf.mxu0
      %v326 = vadd.f32 %v184, %v325
      %v327 = vpop.f32.mrf.mxu0
      %328 = vmatprep.mubr.f32.mxu0 0.0
      %329 = vmatmul.mubr.f32.gmra.mxu0 %v205
      %v330 = vpop.f32.mrf.mxu0
      %v331 = vadd.f32 %v184, %v330
      %v332 = vpop.f32.mrf.mxu0
      %333 = vmatprep.mubr.f32.mxu0 0.0
      %334 = vmatmul.mubr.f32.gmra.mxu0 %v208
      %v335 = vpop.f32.mrf.mxu0
      %v336 = vadd.f32 %v184, %v335
      %v337 = vpop.f32.mrf.mxu0
      %338 = vmatprep.mubr.f32.mxu0 0.0
      %339 = vmatmul.mubr.f32.gmra.mxu0 %v211
      %v340 = vpop.f32.mrf.mxu0
      %v341 = vadd.f32 %v184, %v340
      %v342 = vpop.f32.mrf.mxu0
      %343 = vmatprep.mubr.f32.mxu0 0.0
      %344 = vmatmul.mubr.f32.gmra.mxu0 %v214
      %v345 = vpop.f32.mrf.mxu0
      %v346 = vadd.f32 %v184, %v345
      %v347 = vpop.f32.mrf.mxu0
      %348 = vmatprep.mubr.f32.mxu0 0.0
      %349 = vmatmul.mubr.f32.gmra.mxu0 %v217
      %v350 = vpop.f32.mrf.mxu0
      %v351 = vadd.f32 %v184, %v350
      %v352 = vpop.f32.mrf.mxu0
      %353 = vmatprep.mubr.f32.mxu0 0.0
      %354 = vmatmul.mubr.f32.gmra.mxu0 %v220
      %v355 = vpop.f32.mrf.mxu0
      %v356 = vadd.f32 %v184, %v355
      %v357 = vpop.f32.mrf.mxu0
      %358 = vmatprep.mubr.f32.mxu0 0.0
      %359 = vmatmul.mubr.f32.gmra.mxu0 %v223
      %v360 = vpop.f32.mrf.mxu0
      %v361 = vadd.f32 %v184, %v360
      %v362 = vpop.f32.mrf.mxu0
      %363 = vmatprep.mubr.f32.mxu0 0.0
      %364 = vmatmul.mubr.f32.gmra.mxu0 %v226
      %v365 = vpop.f32.mrf.mxu0
      %v366 = vadd.f32 %v184, %v365
      %v367 = vpop.f32.mrf.mxu0
      %368 = vmatprep.mubr.f32.mxu0 0.0
      %369 = vmatmul.mubr.f32.gmra.mxu0 %v229
      %v370 = vpop.f32.mrf.mxu0
      %v371 = vadd.f32 %v184, %v370
      %v372 = vpop.f32.mrf.mxu0
      %373 = vmatprep.mubr.f32.mxu0 0.0
      %374 = vmatmul.mubr.f32.gmra.mxu0 %v232
      %v375 = vpop.f32.mrf.mxu0
      %v376 = vadd.f32 %v184, %v375
      %v377 = vpop.f32.mrf.mxu0
      %378 = vdwg.mxu0
      %v379 = vmax.f32 %v301, 0.0
      %v380 = vmax.f32 %v306, 0.0
      %v381 = vmax.f32 %v311, 0.0
      %v382 = vmax.f32 %v316, 0.0
      %v383 = vmax.f32 %v321, 0.0
      %v384 = vmax.f32 %v326, 0.0
      %v385 = vmax.f32 %v331, 0.0
      %v386 = vmax.f32 %v336, 0.0
      %v387 = vmax.f32 %v341, 0.0
      %v388 = vmax.f32 %v346, 0.0
      %v389 = vmax.f32 %v351, 0.0
      %v390 = vmax.f32 %v356, 0.0
      %v391 = vmax.f32 %v361, 0.0
      %v392 = vmax.f32 %v366, 0.0
      %v393 = vmax.f32 %v371, 0.0
      %v394 = vmax.f32 %v376, 0.0
      %v395 = vlaneseq
      %v396 = vshrl.u32 %v395, 7
      %v397 = vsub.s32 0, %v396
      %v398 = vrot.slane %v179, %v397
      %399 = vmatprep.subr.mxu0 0.0
      %400 = vmatpush1.msra.mxu0 %v178
      %401 = vmatprep.subr.mxu0 0.0
      %402 = vmatpush1.msra.mxu0 %v177
      %403 = vmatprep.subr.mxu0 0.0
      %404 = vmatpush1.msra.mxu0 %v176
      %405 = vmatprep.subr.mxu0 0.0
      %406 = vmatpush1.msra.mxu0 %v175
      %407 = vmatprep.subr.mxu0 0.0
      %408 = vmatpush1.msra.mxu0 %v174
      %409 = vmatprep.subr.mxu0 0.0
      %410 = vmatpush1.msra.mxu0 %v173
      %411 = vmatprep.subr.mxu0 0.0
      %412 = vmatpush1.msra.mxu0 %v172
      %413 = vmatprep.subr.mxu0 0.0
      %414 = vmatpush1.msra.mxu0 %v171
      %415 = vmatprep.subr.mxu0 0.0
      %416 = vmatpush1.msra.mxu0 %v170
      %417 = vmatprep.subr.mxu0 0.0
      %418 = vmatpush1.msra.mxu0 %v169
      %419 = vmatprep.subr.mxu0 0.0
      %420 = vmatpush1.msra.mxu0 %v168
      %421 = vmatprep.subr.mxu0 0.0
      %422 = vmatpush1.msra.mxu0 %v167
      %423 = vmatprep.subr.mxu0 0.0
      %424 = vmatpush1.msra.mxu0 %v166
      %425 = vmatprep.subr.mxu0 0.0
      %426 = vmatpush1.msra.mxu0 %v165
      %427 = vmatprep.subr.mxu0 0.0
      %428 = vmatpush1.msra.mxu0 %v164
      %429 = vmatprep.subr.mxu0 0.0
      %430 = vmatpush1.msra.mxu0 %v163
      %431 = vmatprep.subr.mxu0 0.0
      %432 = vmatpush2.msra.mxu0 0.0
      %433 = vmatprep.subr.mxu0 0.0
      %434 = vmatpush2.msra.mxu0 0.0
      %435 = vmatprep.subr.mxu0 0.0
      %436 = vmatpush2.msra.mxu0 0.0
      %437 = vmatprep.subr.mxu0 0.0
      %438 = vmatpush2.msra.mxu0 0.0
      %439 = vmatprep.subr.mxu0 0.0
      %440 = vmatpush2.msra.mxu0 0.0
      %441 = vmatprep.subr.mxu0 0.0
      %442 = vmatpush2.msra.mxu0 0.0
      %443 = vmatprep.subr.mxu0 0.0
      %444 = vmatpush2.msra.mxu0 0.0
      %445 = vmatprep.subr.mxu0 0.0
      %446 = vmatpush2.msra.mxu0 0.0
      %447 = vmatprep.subr.mxu0 0.0
      %448 = vmatpush2.msra.mxu0 0.0
      %449 = vmatprep.subr.mxu0 0.0
      %450 = vmatpush2.msra.mxu0 0.0
      %451 = vmatprep.subr.mxu0 0.0
      %452 = vmatpush2.msra.mxu0 0.0
      %453 = vmatprep.subr.mxu0 0.0
      %454 = vmatpush2.msra.mxu0 0.0
      %455 = vmatprep.subr.mxu0 0.0
      %456 = vmatpush2.msra.mxu0 0.0
      %457 = vmatprep.subr.mxu0 0.0
      %458 = vmatpush2.msra.mxu0 0.0
      %459 = vmatprep.subr.mxu0 0.0
      %460 = vmatpush2.msra.mxu0 0.0
      %461 = vmatprep.subr.mxu0 0.0
      %462 = vmatpush2.msra.mxu0 0.0
      %463 = vmatprep.mubr.f32.mxu0 0.0
      %464 = vmatmul.mubr.f32.gmra.mxu0 %v379
      %v465 = vpop.f32.mrf.mxu0
      %v466 = vadd.f32 %v398, %v465
      %v467 = vpop.f32.mrf.mxu0
      %468 = vmatprep.mubr.f32.mxu0 0.0
      %469 = vmatmul.mubr.f32.gmra.mxu0 %v380
      %v470 = vpop.f32.mrf.mxu0
      %v471 = vadd.f32 %v398, %v470
      %v472 = vpop.f32.mrf.mxu0
      %473 = vmatprep.mubr.f32.mxu0 0.0
      %474 = vmatmul.mubr.f32.gmra.mxu0 %v381
      %v475 = vpop.f32.mrf.mxu0
      %v476 = vadd.f32 %v398, %v475
      %v477 = vpop.f32.mrf.mxu0
      %478 = vmatprep.mubr.f32.mxu0 0.0
      %479 = vmatmul.mubr.f32.gmra.mxu0 %v382
      %v480 = vpop.f32.mrf.mxu0
      %v481 = vadd.f32 %v398, %v480
      %v482 = vpop.f32.mrf.mxu0
      %483 = vmatprep.mubr.f32.mxu0 0.0
      %484 = vmatmul.mubr.f32.gmra.mxu0 %v383
      %v485 = vpop.f32.mrf.mxu0
      %v486 = vadd.f32 %v398, %v485
      %v487 = vpop.f32.mrf.mxu0
      %488 = vmatprep.mubr.f32.mxu0 0.0
      %489 = vmatmul.mubr.f32.gmra.mxu0 %v384
      %v490 = vpop.f32.mrf.mxu0
      %v491 = vadd.f32 %v398, %v490
      %v492 = vpop.f32.mrf.mxu0
      %493 = vmatprep.mubr.f32.mxu0 0.0
      %494 = vmatmul.mubr.f32.gmra.mxu0 %v385
      %v495 = vpop.f32.mrf.mxu0
      %v496 = vadd.f32 %v398, %v495
      %v497 = vpop.f32.mrf.mxu0
      %498 = vmatprep.mubr.f32.mxu0 0.0
      %499 = vmatmul.mubr.f32.gmra.mxu0 %v386
      %v500 = vpop.f32.mrf.mxu0
      %v501 = vadd.f32 %v398, %v500
      %v502 = vpop.f32.mrf.mxu0
      %503 = vmatprep.mubr.f32.mxu0 0.0
      %504 = vmatmul.mubr.f32.gmra.mxu0 %v387
      %v505 = vpop.f32.mrf.mxu0
      %v506 = vadd.f32 %v398, %v505
      %v507 = vpop.f32.mrf.mxu0
      %508 = vmatprep.mubr.f32.mxu0 0.0
      %509 = vmatmul.mubr.f32.gmra.mxu0 %v388
      %v510 = vpop.f32.mrf.mxu0
      %v511 = vadd.f32 %v398, %v510
      %v512 = vpop.f32.mrf.mxu0
      %513 = vmatprep.mubr.f32.mxu0 0.0
      %514 = vmatmul.mubr.f32.gmra.mxu0 %v389
      %v515 = vpop.f32.mrf.mxu0
      %v516 = vadd.f32 %v398, %v515
      %v517 = vpop.f32.mrf.mxu0
      %518 = vmatprep.mubr.f32.mxu0 0.0
      %519 = vmatmul.mubr.f32.gmra.mxu0 %v390
      %v520 = vpop.f32.mrf.mxu0
      %v521 = vadd.f32 %v398, %v520
      %v522 = vpop.f32.mrf.mxu0
      %523 = vmatprep.mubr.f32.mxu0 0.0
      %524 = vmatmul.mubr.f32.gmra.mxu0 %v391
      %v525 = vpop.f32.mrf.mxu0
      %v526 = vadd.f32 %v398, %v525
      %v527 = vpop.f32.mrf.mxu0
      %528 = vmatprep.mubr.f32.mxu0 0.0
      %529 = vmatmul.mubr.f32.gmra.mxu0 %v392
      %v530 = vpop.f32.mrf.mxu0
      %v531 = vadd.f32 %v398, %v530
      %v532 = vpop.f32.mrf.mxu0
      %533 = vmatprep.mubr.f32.mxu0 0.0
      %534 = vmatmul.mubr.f32.gmra.mxu0 %v393
      %v535 = vpop.f32.mrf.mxu0
      %v536 = vadd.f32 %v398, %v535
      %v537 = vpop.f32.mrf.mxu0
      %538 = vmatprep.mubr.f32.mxu0 0.0
      %539 = vmatmul.mubr.f32.gmra.mxu0 %v394
      %v540 = vpop.f32.mrf.mxu0
      %v541 = vadd.f32 %v398, %v540
      %v542 = vpop.f32.mrf.mxu0
      %543 = vdwg.mxu0
      %v544 = vmax.f32 %v466, %v486
      %v545 = vmax.f32 %v471, %v491
      %v546 = vmax.f32 %v476, %v496
      %v547 = vmax.f32 %v481, %v501
      %v548 = vmax.f32 %v544, %v506
      %v549 = vmax.f32 %v545, %v511
      %v550 = vmax.f32 %v546, %v516
      %v551 = vmax.f32 %v547, %v521
      %v552 = vmax.f32 %v548, %v526
      %v553 = vmax.f32 %v549, %v531
      %v554 = vmax.f32 %v550, %v536
      %v555 = vmax.f32 %v551, %v541
      %v556 = vmax.f32 %v552, %v553
      %v557 = vmax.f32 %v554, %v555
      %v558 = vmax.f32 %v556, %v557
      %v559 = vrot.slane %v558, 4
      %v560 = vmax.f32 %v558, %v559
      %v561 = vrot.slane %v560, 2
      %v562 = vmax.f32 %v560, %v561
      %v563 = vrot.slane %v562, 1
      %v564 = vmax.f32 %v562, %v563
      %v565 = vsub.f32 %v466, %v564
      %v566 = vsub.f32 %v471, %v564
      %v567 = vsub.f32 %v476, %v564
      %v568 = vsub.f32 %v481, %v564
      %v569 = vsub.f32 %v486, %v564
      %v570 = vsub.f32 %v491, %v564
      %v571 = vsub.f32 %v496, %v564
      %v572 = vsub.f32 %v501, %v564
      %v573 = vsub.f32 %v506, %v564
      %v574 = vsub.f32 %v511, %v564
      %v575 = vsub.f32 %v516, %v564
      %v576 = vsub.f32 %v521, %v564
      %v577 = vsub.f32 %v526, %v564
      %v578 = vsub.f32 %v531, %v564
      %v579 = vsub.f32 %v536, %v564
      %v580 = vsub.f32 %v541, %v564
      %v581 = vmul.f32 %v565, 1.442695
      %v582 = vpow.pop %v581
      %v583 = vmul.f32 %v566, 1.442695
      %v584 = vpow.pop %v583
      %v585 = vmul.f32 %v567, 1.442695
      %v586 = vpow.pop %v585
      %v587 = vmul.f32 %v568, 1.442695
      %v588 = vpow.pop %v587
      %v589 = vmul.f32 %v569, 1.442695
      %v590 = vpow.pop %v589
      %v591 = vmul.f32 %v570, 1.442695
      %v592 = vpow.pop %v591
      %v593 = vmul.f32 %v571, 1.442695
      %v594 = vpow.pop %v593
      %v595 = vmul.f32 %v572, 1.442695
      %v596 = vpow.pop %v595
      %v597 = vmul.f32 %v573, 1.442695
      %v598 = vpow.pop %v597
      %v599 = vmul.f32 %v574, 1.442695
      %v600 = vpow.pop %v599
      %v601 = vmul.f32 %v575, 1.442695
      %v602 = vpow.pop %v601
      %v603 = vmul.f32 %v576, 1.442695
      %v604 = vpow.pop %v603
      %v605 = vmul.f32 %v577, 1.442695
      %v606 = vpow.pop %v605
      %v607 = vmul.f32 %v578, 1.442695
      %v608 = vpow.pop %v607
      %v609 = vmul.f32 %v579, 1.442695
      %v610 = vpow.pop %v609
      %v611 = vmul.f32 %v580, 1.442695
      %v612 = vpow.pop %v611
      %v613 = vadd.f32 %v582, %v584
      %v614 = vadd.f32 %v613, %v586
      %v615 = vadd.f32 %v614, %v588
      %v616 = vadd.f32 %v615, %v590
      %v617 = vadd.f32 %v616, %v592
      %v618 = vadd.f32 %v617, %v594
      %v619 = vadd.f32 %v618, %v596
      %v620 = vadd.f32 %v619, %v598
      %v621 = vadd.f32 %v620, %v600
      %v622 = vadd.f32 %v621, %v602
      %v623 = vadd.f32 %v622, %v604
      %v624 = vadd.f32 %v623, %v606
      %v625 = vadd.f32 %v624, %v608
      %v626 = vadd.f32 %v625, %v610
      %v627 = vadd.f32 %v626, %v612
      %v628 = vrot.slane %v627, 4
      %v629 = vadd.f32 %v627, %v628
      %v630 = vrot.slane %v629, 2
      %v631 = vadd.f32 %v629, %v630
      %v632 = vrot.slane %v631, 1
      %v633 = vadd.f32 %v631, %v632
      %v634 = vrcp.pop %v633
      %v635 = vmul.f32 %v582, %v634
      %v636 = vmul.f32 %v584, %v634
      %v637 = vmul.f32 %v586, %v634
      %v638 = vmul.f32 %v588, %v634
      %v639 = vmul.f32 %v590, %v634
      %v640 = vmul.f32 %v592, %v634
      %v641 = vmul.f32 %v594, %v634
      %v642 = vmul.f32 %v596, %v634
      %v643 = vmul.f32 %v598, %v634
      %v644 = vmul.f32 %v600, %v634
      %v645 = vmul.f32 %v602, %v634
      %v646 = vmul.f32 %v604, %v634
      %v647 = vmul.f32 %v606, %v634
      %v648 = vmul.f32 %v608, %v634
      %v649 = vmul.f32 %v610, %v634
      %v650 = vmul.f32 %v612, %v634
      %vm651 = vcmp.gt.f32.partialorder %v180, 0.0
      %v652 = vsel %vm651, 1, 0
      %v653 = vlaneseq
      %v654 = vshrl.u32 %v653, 7
      %v655 = vsub.s32 0, %v654
      %v656 = vrot.slane %v652, %v655
      %vm657 = vcmp.eq.s32.totalorder %v656, 1
      %v658 = vsel %vm657, %v635, %v466
      %v659 = vsel %vm657, %v636, %v471
      %v660 = vsel %vm657, %v637, %v476
      %v661 = vsel %vm657, %v638, %v481
      %v662 = vsel %vm657, %v639, %v486
      %v663 = vsel %vm657, %v640, %v491
      %v664 = vsel %vm657, %v641, %v496
      %v665 = vsel %vm657, %v642, %v501
      %v666 = vsel %vm657, %v643, %v506
      %v667 = vsel %vm657, %v644, %v511
      %v668 = vsel %vm657, %v645, %v516
      %v669 = vsel %vm657, %v646, %v521
      %v670 = vsel %vm657, %v647, %v526
      %v671 = vsel %vm657, %v648, %v531
      %v672 = vsel %vm657, %v649, %v536
      %v673 = vsel %vm657, %v650, %v541
      %674 = vst [vmem:[%s143] sm:$0xff] %v658
      %675 = vst [vmem:[%s143 + $0x8] sm:$0xff] %v659
      %676 = vst [vmem:[%s143 + $0x10] sm:$0xff] %v660
      %677 = vst [vmem:[%s143 + $0x18] sm:$0xff] %v661
      %678 = vst [vmem:[%s143 + $0x20] sm:$0xff] %v662
      %679 = vst [vmem:[%s143 + $0x28] sm:$0xff] %v663
      %680 = vst [vmem:[%s143 + $0x30] sm:$0xff] %v664
      %681 = vst [vmem:[%s143 + $0x38] sm:$0xff] %v665
      %682 = vst [vmem:[%s143 + $0x40] sm:$0xff] %v666
      %683 = vst [vmem:[%s143 + $0x48] sm:$0xff] %v667
      %684 = vst [vmem:[%s143 + $0x50] sm:$0xff] %v668
      %685 = vst [vmem:[%s143 + $0x58] sm:$0xff] %v669
      %686 = vst [vmem:[%s143 + $0x60] sm:$0xff] %v670
      %687 = vst [vmem:[%s143 + $0x68] sm:$0xff] %v671
      %688 = vst [vmem:[%s143 + $0x70] sm:$0xff] %v672
      %689 = vst [vmem:[%s143 + $0x78] sm:$0xff] %v673
      %p690 = scmp.lt.s32.totalorder %s13, 3
      %s691 = scalar_select %p690, %s13, 3
      %s692 = smul.addr %s691, 16
      %s693 = smul.addr %s692, 8
      %s694 = scalar_lea.vmem %s2, %s693
      // Predicated region
      $region29: #{net_forward_steps.1} parent=27 // pred_check
        %p695 = pneg %p78
      $region30: #{net_forward_steps.1} parent=27 // pred_check_branch
        %697 = sbr.rel (%p695) target = $region32
      $region31: #{net_forward_steps.1} parent=27 // pred_region
        _
      $region32: #{net_forward_steps.1} parent=27 // pred_fallthru
        _
    $region28: #{net_forward_steps.1} parent=5 // pred_fallthru
      _
    %p698 = scmp.le.s32.totalorder 2, %s8
    // Predicated region
    $region33: #{net_forward_steps.1} parent=5 // pred_check
      %p699 = pneg %p698
    $region34: #{net_forward_steps.1} parent=5 // pred_check_branch
      %701 = sbr.rel (%p699) target = $region36
    $region35: #{net_forward_steps.1} parent=5 // pred_region
      %s702 = ssub.s32 %s8, 2
      // Predicated region
      $region37: #{net_forward_steps.1} parent=35 // pred_check
        %p703 = pneg %p84
      $region38: #{net_forward_steps.1} parent=35 // pred_check_branch
        %705 = sbr.rel (%p703) target = $region40
      $region39: #{net_forward_steps.1} parent=35 // pred_region
        %p706 = scmp.lt.s32.totalorder %s14, 3
        %s707 = scalar_select %p706, %s14, 3
        %s708 = smul.addr %s707, 16
        %s709 = smul.addr %s708, 8
        %s710 = scalar_lea.vmem %s2, %s709
      $region40: #{net_forward_steps.1} parent=35 // pred_fallthru
        _
    $region36: #{net_forward_steps.1} parent=5 // pred_fallthru
      _
  $region6: #{net_forward_steps.1} parent=0 // loop_footer
    %s12 = sadd.s32 1, %s8
  $region7: #{net_forward_steps.1} parent=0 // loop_footer_branch
    %7 = sbr.rel target = $region3
  $region8: #{net_forward_steps.1} parent=0 // loop_exit
    _

</llo_original>
